<compile_context>
chip_gen: v7x
topology: tpu7x:2x2x1
jax: 0.10.0
libtpu: 0.0.40
codegen_flags: <defaults>
</compile_context>

<pallas_src>
import numpy as np
import jax
import jax.numpy as jnp
from jax.experimental import pallas as pl
from jax.experimental.pallas import tpu as pltpu


def _round_up(x, m):
    return (x + m - 1) // m * m


def _mlp_kernel(x_ref, w1_ref, b1_ref, w2_ref, b2_ref, w3_ref, b3_ref, o_ref):
    # In-kernel f32 -> bf16 cast (VPU op, hidden under the x DMA / MXU work).
    x = x_ref[...].astype(w1_ref.dtype)
    # fc1 + ReLU (MXU dot, f32 accumulation, f32 epilogue -- v5e-safe).
    h1 = jnp.dot(x, w1_ref[...], preferred_element_type=jnp.float32)
    h1 = jnp.maximum(h1 + b1_ref[...], 0.0)
    # fc2 + ReLU.
    h2 = jnp.dot(h1.astype(w2_ref.dtype), w2_ref[...],
                 preferred_element_type=jnp.float32)
    h2 = jnp.maximum(h2 + b2_ref[...], 0.0)
    # fc3 + Sigmoid (output columns are lane-padded to a multiple of 128, so
    # this store is a full-lane unmasked vst).
    h3 = jnp.dot(h2.astype(w3_ref.dtype), w3_ref[...],
                 preferred_element_type=jnp.float32)
    o_ref[...] = jax.nn.sigmoid(h3 + b3_ref[...]).astype(o_ref.dtype)


def prepare_params(params, *, compute_dtype=jnp.bfloat16):
    """One-time parameter prep (do NOT call per-forward):
    * cast weights to the MXU compute dtype, biases to f32,
    * zero-pad fc3's output dim to a multiple of 128 lanes.
    Returns (prepped_params, true_out_size)."""
    w1, b1 = params["w1"], params["b1"]
    w2, b2 = params["w2"], params["b2"]
    w3, b3 = params["w3"], params["b3"]
    out_size = w3.shape[1]
    out_pad = _round_up(max(out_size, 128), 128)
    if out_pad != out_size:
        w3 = jnp.pad(w3, ((0, 0), (0, out_pad - out_size)))
        b3 = jnp.pad(b3, ((0, 0), (0, out_pad - out_size)))
    prepped = {
        "w1": w1.astype(compute_dtype), "b1": b1.astype(jnp.float32),
        "w2": w2.astype(compute_dtype), "b2": b2.astype(jnp.float32),
        "w3": w3.astype(compute_dtype), "b3": b3.astype(jnp.float32),
    }
    return prepped, out_size


def _choose_tile(batch, block_m):
    """Batch-tile rows. Ragged last tiles are fine (cdiv grid); padded rows'
    outputs are garbage but never read back."""
    if batch <= 16:
        return _round_up(batch, 8)           # tiny batch: one exact tile
    if batch > block_m:
        return block_m                       # multiple tiles already
    if batch >= 256:
        # Split into >= 2 tiles so v7x's second TensorCore is not idle
        # (grid steps are just a sequential loop on single-core v5e/v6e).
        return _round_up(pl.cdiv(batch, 2), 16)
    return _round_up(batch, 16)              # 16 = bf16 sublane packing


def classifier_forward(x, prepped, *, out_size=None, block_m=1024,
                       out_dtype=jnp.bfloat16):
    """x: [B, input_size] float32. prepped: output of prepare_params().
    If out_size is None, returns the lane-dense padded [B, out_pad] buffer
    (no wrapper slice pass); otherwise slices to [B, out_size]."""
    w1, b1 = prepped["w1"], prepped["b1"]
    w2, b2 = prepped["w2"], prepped["b2"]
    w3, b3 = prepped["w3"], prepped["b3"]
    B, in_size = x.shape
    h1_size = w1.shape[1]
    h2_size = w2.shape[1]
    out_pad = w3.shape[1]

    tm = _choose_tile(B, block_m)
    grid = (pl.cdiv(B, tm),)

    # Small weights/biases: constant index_map -> resident in VMEM across tiles.
    resident = lambda a: pl.BlockSpec(a.shape, lambda i: (0, 0))

    weight_bytes = sum(int(a.size) * a.dtype.itemsize
                       for a in (w1, b1, w2, b2, w3, b3))
    cost = pl.CostEstimate(
        flops=2 * B * (in_size * h1_size + h1_size * h2_size + h2_size * out_pad),
        transcendentals=B * out_pad,   # sigmoid -> EUP exp
        bytes_accessed=int(x.size) * x.dtype.itemsize + weight_bytes
                       + B * out_pad * np.dtype(out_dtype).itemsize,
    )

    # VMEM note: at tm=1024/2048 the double-buffered working set is ~1-3 MiB,
    # far under every generation's scoped default (16 MiB on v5e); only set
    # vmem_limit_bytes if tm is pushed toward >=8-16K rows.
    out = pl.pallas_call(
        _mlp_kernel,
        out_shape=jax.ShapeDtypeStruct((B, out_pad), out_dtype),
        grid=grid,
        in_specs=[
            pl.BlockSpec((tm, in_size), lambda i: (i, 0)),   # x tile, pipelined
            resident(w1), resident(b1),
            resident(w2), resident(b2),
            resident(w3), resident(b3),
        ],
        out_specs=pl.BlockSpec((tm, out_pad), lambda i: (i, 0)),
        compiler_params=pltpu.CompilerParams(
            # Batch tiles are independent; lets megacore shard the axis.
            dimension_semantics=("parallel",)),
        cost_estimate=cost,
    )(x, w1, b1, w2, b2, w3, b3)

    if out_size is None:
        return out
    return out[:B, :out_size]


def init_params(key, input_size, hidden_size, output_size):
    """Deterministic init mimicking PyTorch Linear default (uniform +-1/sqrt(fan_in)).
    Weights are stored as [in, out] (transposed vs. torch's [out, in])."""
    def linear(key, fan_in, fan_out):
        kw, kb = jax.random.split(key)
        bound = 1.0 / jnp.sqrt(fan_in)
        w = jax.random.uniform(kw, (fan_in, fan_out), jnp.float32, -bound, bound)
        b = jax.random.uniform(kb, (1, fan_out), jnp.float32, -bound, bound)
        return w, b

    k1, k2, k3 = jax.random.split(key, 3)
    h2 = hidden_size // 2
    w1, b1 = linear(k1, input_size, hidden_size)
    w2, b2 = linear(k2, hidden_size, h2)
    w3, b3 = linear(k3, h2, output_size)
    return {"w1": w1, "b1": b1, "w2": w2, "b2": b2, "w3": w3, "b3": b3}


def _reference(x, params, compute_dtype=jnp.bfloat16):
    """Plain-JAX reference following the same bf16-operand / f32-accumulate path."""
    w1 = params["w1"].astype(compute_dtype)
    w2 = params["w2"].astype(compute_dtype)
    w3 = params["w3"].astype(compute_dtype)
    b1 = params["b1"].astype(jnp.float32)
    b2 = params["b2"].astype(jnp.float32)
    b3 = params["b3"].astype(jnp.float32)
    h = jnp.dot(x.astype(compute_dtype), w1,
                preferred_element_type=jnp.float32) + b1
    h = jnp.maximum(h, 0.0)
    h = jnp.dot(h.astype(compute_dtype), w2,
                preferred_element_type=jnp.float32) + b2
    h = jnp.maximum(h, 0.0)
    h = jnp.dot(h.astype(compute_dtype), w3,
                preferred_element_type=jnp.float32) + b3
    return jax.nn.sigmoid(h)


if __name__ == "__main__":
    key = jax.random.PRNGKey(0)
    kx, kp = jax.random.split(key)

    batch = 8
    input_size = 32
    hidden_size = 32   # -> hidden // 2 = 16
    output_size = 8

    x = jax.random.normal(kx, (batch, input_size), jnp.float32)
    params = init_params(kp, input_size, hidden_size, output_size)
    prepped, out_size = prepare_params(params)

    out = classifier_forward(x, prepped, out_size=out_size)
    out = jax.block_until_ready(out)

    ref = _reference(x, params)
    assert out.shape == (batch, output_size)
    # Output is stored as bf16 (halves the dominant HBM writeback stream);
    # bf16 quantization of sigmoid values near 0.5 is ~2e-3, so compare at 5e-3.
    err = float(jnp.max(jnp.abs(out.astype(jnp.float32) - ref)))
    assert err < 5e-3, f"max abs err {err}"

    print("KERNEL_OK")
</pallas_src>

<mosaic_0001>
module attributes {stable_mosaic.version = 11 : i64} {
  func.func @_mlp_kernel(%arg0: i32, %arg1: memref<8x32xf32, #tpu.memory_space<vmem>>, %arg2: memref<32x32xbf16, #tpu.memory_space<vmem>>, %arg3: memref<1x32xf32, #tpu.memory_space<vmem>>, %arg4: memref<32x16xbf16, #tpu.memory_space<vmem>>, %arg5: memref<1x16xf32, #tpu.memory_space<vmem>>, %arg6: memref<16x128xbf16, #tpu.memory_space<vmem>>, %arg7: memref<1x128xf32, #tpu.memory_space<vmem>>, %arg8: memref<8x128xbf16, #tpu.memory_space<vmem>>) attributes {dimension_semantics = [#tpu.dimension_semantics<parallel>], iteration_bounds = array<i64: 1>, scalar_prefetch = 0 : i64, scratch_operands = 0 : i64, tpu.core_type = #tpu.core_type<tc>, window_params = [{transform_indices = @transform_0, window_bounds = array<i64: 8, 32>}, {pipeline_mode = #tpu.pipeline_mode<synchronous>, transform_indices = @transform_1, window_bounds = array<i64: 32, 32>}, {pipeline_mode = #tpu.pipeline_mode<synchronous>, transform_indices = @transform_2, window_bounds = array<i64: 1, 32>}, {pipeline_mode = #tpu.pipeline_mode<synchronous>, transform_indices = @transform_3, window_bounds = array<i64: 32, 16>}, {pipeline_mode = #tpu.pipeline_mode<synchronous>, transform_indices = @transform_4, window_bounds = array<i64: 1, 16>}, {pipeline_mode = #tpu.pipeline_mode<synchronous>, transform_indices = @transform_5, window_bounds = array<i64: 16, 128>}, {pipeline_mode = #tpu.pipeline_mode<synchronous>, transform_indices = @transform_6, window_bounds = array<i64: 1, 128>}, {transform_indices = @transform_7, window_bounds = array<i64: 8, 128>}]} {
    %c0 = arith.constant 0 : index
    %c0_0 = arith.constant 0 : index
    %0 = vector.load %arg1[%c0, %c0_0] : memref<8x32xf32, #tpu.memory_space<vmem>>, vector<8x32xf32>
    %1 = arith.truncf %0 : vector<8x32xf32> to vector<8x32xbf16>
    %c0_1 = arith.constant 0 : index
    %c0_2 = arith.constant 0 : index
    %2 = vector.load %arg2[%c0_1, %c0_2] : memref<32x32xbf16, #tpu.memory_space<vmem>>, vector<32x32xbf16>
    %cst = arith.constant dense<0.000000e+00> : vector<8x32xf32>
    %3 = tpu.matmul %1, %2, %cst {dimension_numbers = #tpu.dot_dimension_numbers<[1], [0], [0], [1], [0, 0, 1, 1], [], []>} : vector<8x32xbf16>, vector<32x32xbf16>, vector<8x32xf32> -> vector<8x32xf32>
    %c0_3 = arith.constant 0 : index
    %c0_4 = arith.constant 0 : index
    %4 = vector.load %arg3[%c0_3, %c0_4] : memref<1x32xf32, #tpu.memory_space<vmem>>, vector<1x32xf32>
    %5 = vector.broadcast %4 : vector<1x32xf32> to vector<8x32xf32>
    %6 = arith.addf %3, %5 : vector<8x32xf32>
    %cst_5 = arith.constant 0.000000e+00 : f32
    %7 = vector.broadcast %cst_5 : f32 to vector<8x32xf32>
    %8 = arith.maximumf %6, %7 : vector<8x32xf32>
    %9 = arith.truncf %8 : vector<8x32xf32> to vector<8x32xbf16>
    %c0_6 = arith.constant 0 : index
    %c0_7 = arith.constant 0 : index
    %10 = vector.load %arg4[%c0_6, %c0_7] : memref<32x16xbf16, #tpu.memory_space<vmem>>, vector<32x16xbf16>
    %cst_8 = arith.constant dense<0.000000e+00> : vector<8x16xf32>
    %11 = tpu.matmul %9, %10, %cst_8 {dimension_numbers = #tpu.dot_dimension_numbers<[1], [0], [0], [1], [0, 0, 1, 1], [], []>} : vector<8x32xbf16>, vector<32x16xbf16>, vector<8x16xf32> -> vector<8x16xf32>
    %c0_9 = arith.constant 0 : index
    %c0_10 = arith.constant 0 : index
    %12 = vector.load %arg5[%c0_9, %c0_10] : memref<1x16xf32, #tpu.memory_space<vmem>>, vector<1x16xf32>
    %13 = vector.broadcast %12 : vector<1x16xf32> to vector<8x16xf32>
    %14 = arith.addf %11, %13 : vector<8x16xf32>
    %cst_11 = arith.constant 0.000000e+00 : f32
    %15 = vector.broadcast %cst_11 : f32 to vector<8x16xf32>
    %16 = arith.maximumf %14, %15 : vector<8x16xf32>
    %17 = arith.truncf %16 : vector<8x16xf32> to vector<8x16xbf16>
    %c0_12 = arith.constant 0 : index
    %c0_13 = arith.constant 0 : index
    %18 = vector.load %arg6[%c0_12, %c0_13] : memref<16x128xbf16, #tpu.memory_space<vmem>>, vector<16x128xbf16>
    %cst_14 = arith.constant dense<0.000000e+00> : vector<8x128xf32>
    %19 = tpu.matmul %17, %18, %cst_14 {dimension_numbers = #tpu.dot_dimension_numbers<[1], [0], [0], [1], [0, 0, 1, 1], [], []>} : vector<8x16xbf16>, vector<16x128xbf16>, vector<8x128xf32> -> vector<8x128xf32>
    %c0_15 = arith.constant 0 : index
    %c0_16 = arith.constant 0 : index
    %20 = vector.load %arg7[%c0_15, %c0_16] : memref<1x128xf32, #tpu.memory_space<vmem>>, vector<1x128xf32>
    %21 = vector.broadcast %20 : vector<1x128xf32> to vector<8x128xf32>
    %22 = arith.addf %19, %21 : vector<8x128xf32>
    %23 = arith.negf %22 : vector<8x128xf32>
    %24 = math.exp %23 : vector<8x128xf32>
    %cst_17 = arith.constant 1.000000e+00 : f32
    %25 = vector.broadcast %cst_17 : f32 to vector<8x128xf32>
    %26 = arith.addf %25, %24 : vector<8x128xf32>
    %27 = arith.divf %25, %26 : vector<8x128xf32>
    %28 = arith.truncf %27 : vector<8x128xf32> to vector<8x128xbf16>
    %c0_18 = arith.constant 0 : index
    %c0_19 = arith.constant 0 : index
    %29 = vector.load %arg8[%c0_18, %c0_19] : memref<8x128xbf16, #tpu.memory_space<vmem>>, vector<8x128xbf16>
    tpu.vector_store %arg8[%c0_18, %c0_19], %28 {strides = array<i32>} : memref<8x128xbf16, #tpu.memory_space<vmem>>, vector<8x128xbf16>,
    return
  }
  func.func @transform_0(%arg0: i32) -> (i32, i32) {
    %c0_i32 = arith.constant 0 : i32
    %c0_i32_0 = arith.constant 0 : i32
    return %arg0, %c0_i32 : i32, i32
  }
  func.func @transform_1(%arg0: i32) -> (i32, i32) {
    %c0_i32 = arith.constant 0 : i32
    %c0_i32_0 = arith.constant 0 : i32
    %c0_i32_1 = arith.constant 0 : i32
    return %c0_i32, %c0_i32_0 : i32, i32
  }
  func.func @transform_2(%arg0: i32) -> (i32, i32) {
    %c0_i32 = arith.constant 0 : i32
    %c0_i32_0 = arith.constant 0 : i32
    %c0_i32_1 = arith.constant 0 : i32
    return %c0_i32, %c0_i32_0 : i32, i32
  }
  func.func @transform_3(%arg0: i32) -> (i32, i32) {
    %c0_i32 = arith.constant 0 : i32
    %c0_i32_0 = arith.constant 0 : i32
    %c0_i32_1 = arith.constant 0 : i32
    return %c0_i32, %c0_i32_0 : i32, i32
  }
  func.func @transform_4(%arg0: i32) -> (i32, i32) {
    %c0_i32 = arith.constant 0 : i32
    %c0_i32_0 = arith.constant 0 : i32
    %c0_i32_1 = arith.constant 0 : i32
    return %c0_i32, %c0_i32_0 : i32, i32
  }
  func.func @transform_5(%arg0: i32) -> (i32, i32) {
    %c0_i32 = arith.constant 0 : i32
    %c0_i32_0 = arith.constant 0 : i32
    %c0_i32_1 = arith.constant 0 : i32
    return %c0_i32, %c0_i32_0 : i32, i32
  }
  func.func @transform_6(%arg0: i32) -> (i32, i32) {
    %c0_i32 = arith.constant 0 : i32
    %c0_i32_0 = arith.constant 0 : i32
    %c0_i32_1 = arith.constant 0 : i32
    return %c0_i32, %c0_i32_0 : i32, i32
  }
  func.func @transform_7(%arg0: i32) -> (i32, i32) {
    %c0_i32 = arith.constant 0 : i32
    %c0_i32_0 = arith.constant 0 : i32
    return %arg0, %c0_i32 : i32, i32
  }
}

</mosaic_0001>

<llo_original>
// kernel: tpu_custom_call.1
$region0: #{tpu_custom_call.1}
  #allocation0 [shape = 'u32[]', space=smem, size = 0x4, offset = 0x4, fixed_abs, tag = 'smem constant byte address 0x4 - core index']
  #allocation1 [shape = 'u32[144,128]{1,0:T(1,128)}', space=vmem, size = 0x12000, scoped, tag = 'internal scratch']
  %s0 = inlined_call_operand.vmem [shape: f32[8,32], index: 0, kind: input, shape index: {}]
  %s1 = inlined_call_operand.vmem [shape: bf16[32,32], index: 1, kind: input, shape index: {}]
  %s2 = inlined_call_operand.vmem [shape: f32[1,32], index: 2, kind: input, shape index: {}]
  %s3 = inlined_call_operand.vmem [shape: bf16[32,16], index: 3, kind: input, shape index: {}]
  %s4 = inlined_call_operand.vmem [shape: f32[1,16], index: 4, kind: input, shape index: {}]
  %s5 = inlined_call_operand.vmem [shape: bf16[16,128], index: 5, kind: input, shape index: {}]
  %s6 = inlined_call_operand.vmem [shape: f32[1,128], index: 6, kind: input, shape index: {}]
  %s7 = inlined_call_operand.hbm [shape: bf16[8,128], index: 7, kind: output, shape index: {}]
  %s8 = sld [smem:[#allocation0]]
  $region38: #{tpu_custom_call.1} parent=0
    _
  %s10 = ssub.s32 1, %s8
  %s11 = scalar_select 0, %s10, %s8
  $region1: #{tpu_custom_call.1} parent=0
    #allocation2 [shape = 'u8[2048]{0}', space=vmem, size = 0x800, scoped, tag = 'output window, operand 0, single buffered']
    #allocation3 [shape = 's32[1]{0}', space=sflag, size = 0x4, scoped, tag = 'scoped memory for tpu_custom_call.1']
    %12 = vsyncpa [#allocation3], 0
    // Predicated region
    $region2: #{tpu_custom_call.1} parent=1 // pred_check
      _
    $region3: #{tpu_custom_call.1} parent=1 // pred_check_branch
      %14 = sbr.rel (0) target = $region5
    $region4: #{tpu_custom_call.1} parent=1 // pred_region
      _
    $region5: #{tpu_custom_call.1} parent=1 // pred_fallthru
      _
    // Predicated region
    $region6: #{tpu_custom_call.1} parent=1 // pred_check
      _
    $region7: #{tpu_custom_call.1} parent=1 // pred_check_branch
      %16 = sbr.rel (0) target = $region9
    $region8: #{tpu_custom_call.1} parent=1 // pred_region
      _
    $region9: #{tpu_custom_call.1} parent=1 // pred_fallthru
      _
    // Predicated region
    $region10: #{tpu_custom_call.1} parent=1 // pred_check
      _
    $region11: #{tpu_custom_call.1} parent=1 // pred_check_branch
      %18 = sbr.rel (0) target = $region13
    $region12: #{tpu_custom_call.1} parent=1 // pred_region
      _
    $region13: #{tpu_custom_call.1} parent=1 // pred_fallthru
      _
    // Predicated region
    $region14: #{tpu_custom_call.1} parent=1 // pred_check
      _
    $region15: #{tpu_custom_call.1} parent=1 // pred_check_branch
      %20 = sbr.rel (0) target = $region17
    $region16: #{tpu_custom_call.1} parent=1 // pred_region
      _
    $region17: #{tpu_custom_call.1} parent=1 // pred_fallthru
      _
    // Predicated region
    $region18: #{tpu_custom_call.1} parent=1 // pred_check
      _
    $region19: #{tpu_custom_call.1} parent=1 // pred_check_branch
      %22 = sbr.rel (0) target = $region21
    $region20: #{tpu_custom_call.1} parent=1 // pred_region
      _
    $region21: #{tpu_custom_call.1} parent=1 // pred_fallthru
      _
    // Predicated region
    $region22: #{tpu_custom_call.1} parent=1 // pred_check
      _
    $region23: #{tpu_custom_call.1} parent=1 // pred_check_branch
      %24 = sbr.rel (0) target = $region25
    $region24: #{tpu_custom_call.1} parent=1 // pred_region
      _
    $region25: #{tpu_custom_call.1} parent=1 // pred_fallthru
      _
    // Predicated region
    $region26: #{tpu_custom_call.1} parent=1 // pred_check
      _
    $region27: #{tpu_custom_call.1} parent=1 // pred_check_branch
      %26 = sbr.rel (0) target = $region29
    $region28: #{tpu_custom_call.1} parent=1 // pred_region
      _
    $region29: #{tpu_custom_call.1} parent=1 // pred_fallthru
      _
    %v28 = vld [vmem:[%s0] sm:$0xff]
    %v29 = vpack.c.bf16 %v28, %v28
    %v30 = vld [vmem:[%s1] sm:$0xf]
    %v31 = vld [vmem:[%s1 + $0x4] sm:$0xf]
    %v32 = vld [vmem:[%s1 + $0x8] sm:$0xf]
    %v33 = vld [vmem:[%s1 + $0xc] sm:$0xf]
    %v34 = vld [vmem:[%s2] sm:$0x1]
    %v36 = vlaneseq
    %v37 = vshrl.u32 %v36, 7
    %v38 = vsub.s32 0, %v37
    %v39 = vrot.slane %v34, %v38
    %v45 = vunpack.c.l.b16 %v30
    %v46 = vunpack.c.l.b16 %v31
    %v47 = vunpack.c.l.b16 %v32
    %v48 = vunpack.c.l.b16 %v33
    %v49 = vpack.c.b16 %v46, %v45
    %v50 = vpack.c.b16 %v48, %v47
    %vm53 = vcmask 261120
    %v55 = vsel %vm53, %v29, 0
    %57 = vmatprep.subr.bf16.mxu0 0
    %58 = vmatpush1.bf16.msra.mxu0 %v49
    %59 = vmatprep.subr.bf16.mxu0 0
    %60 = vmatpush1.bf16.msra.mxu0 %v50
    %61 = vmatprep.subr.bf16.mxu0 0
    %62 = vmatpush1.bf16.msra.mxu0 0
    %63 = vmatprep.subr.bf16.mxu0 0
    %64 = vmatpush1.bf16.msra.mxu0 0
    %65 = vmatprep.subr.bf16.mxu0 0
    %66 = vmatpush1.bf16.msra.mxu0 0
    %67 = vmatprep.subr.bf16.mxu0 0
    %68 = vmatpush1.bf16.msra.mxu0 0
    %69 = vmatprep.subr.bf16.mxu0 0
    %70 = vmatpush1.bf16.msra.mxu0 0
    %71 = vmatprep.subr.bf16.mxu0 0
    %72 = vmatpush1.bf16.msra.mxu0 0
    %73 = vmatprep.subr.bf16.mxu0 0
    %74 = vmatpush1.bf16.msra.mxu0 0
    %75 = vmatprep.subr.bf16.mxu0 0
    %76 = vmatpush1.bf16.msra.mxu0 0
    %77 = vmatprep.subr.bf16.mxu0 0
    %78 = vmatpush1.bf16.msra.mxu0 0
    %79 = vmatprep.subr.bf16.mxu0 0
    %80 = vmatpush1.bf16.msra.mxu0 0
    %81 = vmatprep.subr.bf16.mxu0 0
    %82 = vmatpush1.bf16.msra.mxu0 0
    %83 = vmatprep.subr.bf16.mxu0 0
    %84 = vmatpush1.bf16.msra.mxu0 0
    %85 = vmatprep.subr.bf16.mxu0 0
    %86 = vmatpush1.bf16.msra.mxu0 0
    %87 = vmatprep.subr.bf16.mxu0 0
    %88 = vmatpush1.bf16.msra.mxu0 0
    %89 = vmatprep.mubr.bf16.mxu0 0
    %90 = vmatmul.mubr.bf16.gmra.mrb[0].mxu0 %v55
    %v91 = vpop.f32.mrb[0].mxu0
    %v92 = vadd.f32 %v39, %v91
    %v93 = vpop.f32.mrb[0].mxu0
    %v94 = vpop.f32.mrb[0].mxu0
    %v95 = vpop.f32.mrb[0].mxu0
    %96 = vdwg.mxu0
    %v97 = vmax.f32 %v92, 0.0
    %v98 = vpack.c.bf16 %v97, %v97
    %v99 = vld [vmem:[%s3] sm:$0xf]
    %v100 = vld [vmem:[%s3 + $0x4] sm:$0xf]
    %v101 = vld [vmem:[%s3 + $0x8] sm:$0xf]
    %v102 = vld [vmem:[%s3 + $0xc] sm:$0xf]
    %v103 = vld [vmem:[%s4] sm:$0x1]
    %v105 = vlaneseq
    %v106 = vshrl.u32 %v105, 7
    %v107 = vsub.s32 0, %v106
    %v108 = vrot.slane %v103, %v107
    %v114 = vunpack.c.l.b16 %v99
    %v115 = vunpack.c.l.b16 %v100
    %v116 = vunpack.c.l.b16 %v101
    %v117 = vunpack.c.l.b16 %v102
    %v118 = vpack.c.b16 %v115, %v114
    %v119 = vpack.c.b16 %v117, %v116
    %v123 = vsel %vm53, %v98, 0
    %125 = vmatprep.subr.bf16.mxu0 0
    %126 = vmatpush1.bf16.msra.mxu0 %v118
    %127 = vmatprep.subr.bf16.mxu0 0
    %128 = vmatpush1.bf16.msra.mxu0 %v119
    %129 = vmatprep.subr.bf16.mxu0 0
    %130 = vmatpush1.bf16.msra.mxu0 0
    %131 = vmatprep.subr.bf16.mxu0 0
    %132 = vmatpush1.bf16.msra.mxu0 0
    %133 = vmatprep.subr.bf16.mxu0 0
    %134 = vmatpush1.bf16.msra.mxu0 0
    %135 = vmatprep.subr.bf16.mxu0 0
    %136 = vmatpush1.bf16.msra.mxu0 0
    %137 = vmatprep.subr.bf16.mxu0 0
    %138 = vmatpush1.bf16.msra.mxu0 0
    %139 = vmatprep.subr.bf16.mxu0 0
    %140 = vmatpush1.bf16.msra.mxu0 0
    %141 = vmatprep.subr.bf16.mxu0 0
    %142 = vmatpush1.bf16.msra.mxu0 0
    %143 = vmatprep.subr.bf16.mxu0 0
    %144 = vmatpush1.bf16.msra.mxu0 0
    %145 = vmatprep.subr.bf16.mxu0 0
    %146 = vmatpush1.bf16.msra.mxu0 0
    %147 = vmatprep.subr.bf16.mxu0 0
    %148 = vmatpush1.bf16.msra.mxu0 0
    %149 = vmatprep.subr.bf16.mxu0 0
    %150 = vmatpush1.bf16.msra.mxu0 0
    %151 = vmatprep.subr.bf16.mxu0 0
    %152 = vmatpush1.bf16.msra.mxu0 0
    %153 = vmatprep.subr.bf16.mxu0 0
    %154 = vmatpush1.bf16.msra.mxu0 0
    %155 = vmatprep.subr.bf16.mxu0 0
    %156 = vmatpush1.bf16.msra.mxu0 0
    %157 = vmatprep.mubr.bf16.mxu0 0
    %158 = vmatmul.mubr.bf16.gmra.mrb[0].mxu0 %v123
    %v159 = vpop.f32.mrb[0].mxu0
    %v160 = vadd.f32 %v108, %v159
    %v161 = vpop.f32.mrb[0].mxu0
    %v162 = vpop.f32.mrb[0].mxu0
    %v163 = vpop.f32.mrb[0].mxu0
    %164 = vdwg.mxu0
    %v165 = vmax.f32 %v160, 0.0
    %v166 = vpack.c.bf16 %v165, %v165
    %v167 = vld [vmem:[%s5] sm:$0xf]
    %v168 = vld [vmem:[%s5 + $0x4] sm:$0xf]
    %v169 = vld [vmem:[%s6] sm:$0x1]
    %v171 = vlaneseq
    %v172 = vshrl.u32 %v171, 7
    %v173 = vsub.s32 0, %v172
    %v174 = vrot.slane %v169, %v173
    %v178 = vunpack.c.l.b16 %v167
    %v179 = vunpack.c.l.b16 %v168
    %v180 = vpack.c.b16 %v179, %v178
    %vm182 = vcmask 130048
    %v184 = vsel %vm182, %v166, 0
    %186 = vmatprep.subr.bf16.mxu0 0
    %187 = vmatpush1.bf16.msra.mxu0 %v180
    %188 = vmatprep.subr.bf16.mxu0 0
    %189 = vmatpush1.bf16.msra.mxu0 0
    %190 = vmatprep.subr.bf16.mxu0 0
    %191 = vmatpush1.bf16.msra.mxu0 0
    %192 = vmatprep.subr.bf16.mxu0 0
    %193 = vmatpush1.bf16.msra.mxu0 0
    %194 = vmatprep.subr.bf16.mxu0 0
    %195 = vmatpush1.bf16.msra.mxu0 0
    %196 = vmatprep.subr.bf16.mxu0 0
    %197 = vmatpush1.bf16.msra.mxu0 0
    %198 = vmatprep.subr.bf16.mxu0 0
    %199 = vmatpush1.bf16.msra.mxu0 0
    %200 = vmatprep.subr.bf16.mxu0 0
    %201 = vmatpush1.bf16.msra.mxu0 0
    %202 = vmatprep.subr.bf16.mxu0 0
    %203 = vmatpush1.bf16.msra.mxu0 0
    %204 = vmatprep.subr.bf16.mxu0 0
    %205 = vmatpush1.bf16.msra.mxu0 0
    %206 = vmatprep.subr.bf16.mxu0 0
    %207 = vmatpush1.bf16.msra.mxu0 0
    %208 = vmatprep.subr.bf16.mxu0 0
    %209 = vmatpush1.bf16.msra.mxu0 0
    %210 = vmatprep.subr.bf16.mxu0 0
    %211 = vmatpush1.bf16.msra.mxu0 0
    %212 = vmatprep.subr.bf16.mxu0 0
    %213 = vmatpush1.bf16.msra.mxu0 0
    %214 = vmatprep.subr.bf16.mxu0 0
    %215 = vmatpush1.bf16.msra.mxu0 0
    %216 = vmatprep.subr.bf16.mxu0 0
    %217 = vmatpush1.bf16.msra.mxu0 0
    %218 = vmatprep.mubr.bf16.mxu0 0
    %219 = vmatmul.mubr.bf16.gmra.mrb[0].mxu0 %v184
    %v220 = vpop.f32.mrb[0].mxu0
    %v221 = vadd.f32 %v174, %v220
    %v222 = vpop.f32.mrb[0].mxu0
    %v223 = vpop.f32.mrb[0].mxu0
    %v224 = vpop.f32.mrb[0].mxu0
    %225 = vdwg.mxu0
    %v226 = vxor.u32 %v221, 2147483648
    %v227 = vmul.f32 %v226, 1.442695
    %v228 = vpow.pop %v227
    %v229 = vadd.f32 %v228, 1.0
    %v230 = vrcp.pop %v229
    %v231 = vmul.f32 1.0, %v230
    %v232 = vpack.c.bf16 %v231, %v231
    %233 = vst [vmem:[#allocation2] sm:$0xf] %v232
    // Predicated region
    $region30: #{tpu_custom_call.1} parent=1 // pred_check
      _
    $region31: #{tpu_custom_call.1} parent=1 // pred_check_branch
      %235 = sbr.rel (0) target = $region33
    $region32: #{tpu_custom_call.1} parent=1 // pred_region
      %s237 = ssub.s32 64, 64
      %238 = vsyncadd [#allocation3], %s237
      %s240 = sshll.u32 [#allocation2], 4
      %s241 = int_to_ptr.vmem [resolvable:$true] %s240
      %243 = dma.vmem_to_hbm [thread:$0]  %s241, 64, %s7, [#allocation3]
    $region33: #{tpu_custom_call.1} parent=1 // pred_fallthru
      _
    // Predicated region
    $region34: #{tpu_custom_call.1} parent=1 // pred_check
      _
    $region35: #{tpu_custom_call.1} parent=1 // pred_check_branch
      %245 = sbr.rel (0) target = $region37
    $region36: #{tpu_custom_call.1} parent=1 // pred_region
      %246 = dma.done [#allocation3], 64
    $region37: #{tpu_custom_call.1} parent=1 // pred_fallthru
      _
    %247 = vsyncpa [#allocation3], 1

</llo_original>
